<compile_context>
chip_gen: v5e
topology: v5e:2x2
jax: 0.10.0
libtpu: 0.0.40
codegen_flags: <defaults>
</compile_context>

<pallas_src>
import functools

import jax
import jax.numpy as jnp
from jax.experimental import pallas as pl
from jax.experimental.pallas import tpu as pltpu


_ACTIVATIONS = ("relu", "lrelu", "prelu", "selu", "tanh", "none")


def _round_up(x, m):
    return ((x + m - 1) // m) * m


def _pick_tile(dim, max_tile, align):
    """Pick a tile (multiple of `align`, <= max_tile) for `dim` (already a
    multiple of `align`). Prefers the largest tile with <=12.5% padding waste,
    otherwise the tile minimizing the padded extent. Returns (tile, padded_dim)."""
    max_tile = max(align, min(max_tile, dim))
    max_tile = (max_tile // align) * align
    best = None
    t = max_tile
    while t >= align:
        padded = _round_up(dim, t)
        if (padded - dim) * 8 <= dim:
            return t, padded
        if best is None or padded < best[1]:
            best = (t, padded)
        t -= align
    return best


def _apply_activation(out, activation):
    if activation == "relu":
        return jnp.maximum(out, 0.0)
    if activation == "lrelu":
        return jnp.where(out >= 0.0, out, 0.2 * out)
    if activation == "prelu":
        # nn.PReLU() default slope 0.25.
        # TODO(synk): thread a learned PReLU slope in as a scalar input if trained.
        return jnp.where(out >= 0.0, out, 0.25 * out)
    if activation == "selu":
        alpha = 1.6732632423543772848170429916717
        scale = 1.0507009873554804934193349852946
        return scale * jnp.where(out > 0.0, out, alpha * (jnp.exp(out) - 1.0))
    if activation == "tanh":
        return jnp.tanh(out)
    return out  # "none"


def _kernel_f32_out(x_ref, w_ref, b_ref, o_ref, *, activation):
    # x: (tm, tk), w: (tk, tn) pre-transposed, b: (1, tn), o: (tm, tn) float32.
    # Output block index is constant across k -> o_ref is resident in VMEM and
    # serves as the accumulator (no extra scratch buffer).
    k = pl.program_id(2)

    @pl.when(k == 0)
    def _():
        o_ref[...] = jnp.zeros_like(o_ref)

    o_ref[...] += jnp.dot(x_ref[...], w_ref[...], preferred_element_type=jnp.float32)

    @pl.when(k == pl.num_programs(2) - 1)
    def _():
        o_ref[...] = _apply_activation(
            o_ref[...] + b_ref[...].astype(jnp.float32), activation
        )


def _kernel_narrow_out(x_ref, w_ref, b_ref, o_ref, acc_ref, *, activation):
    # Same as above but with a float32 scratch accumulator for narrow output
    # dtypes (e.g. bf16 end-to-end): single cast/store at the last K step.
    k = pl.program_id(2)

    @pl.when(k == 0)
    def _():
        acc_ref[...] = jnp.zeros_like(acc_ref)

    acc_ref[...] += jnp.dot(x_ref[...], w_ref[...], preferred_element_type=jnp.float32)

    @pl.when(k == pl.num_programs(2) - 1)
    def _():
        out = _apply_activation(
            acc_ref[...] + b_ref[...].astype(jnp.float32), activation
        )
        o_ref[...] = out.astype(o_ref.dtype)


def prepare_params(weight, bias, *, max_tn=512, max_tk=1024):
    """One-time weight/bias preparation (hoist out of the hot path for repeated
    inference): transpose the PyTorch (out_dim, in_dim) weight to (K, N) and
    zero-pad K/N up to multiples of 128 that the chosen tiles divide."""
    N, K = weight.shape
    assert bias.shape == (N,)
    n128 = _round_up(N, 128)
    k128 = _round_up(K, 128)
    tn, np_ = _pick_tile(n128, max_tn, 128)
    tk, kp = _pick_tile(k128, max_tk, 128)
    wt = weight.T  # (K, N) — no per-tile transpose inside the kernel.
    if (kp, np_) != (K, N):
        wt = jnp.pad(wt, ((0, kp - K), (0, np_ - N)))
    b = bias if np_ == N else jnp.pad(bias, (0, np_ - N))
    b = b.reshape(1, np_)
    return dict(wt=wt, b=b, N=N, K=K, Np=np_, Kp=kp, tn=tn, tk=tk)


def linear_block_apply(x, params, *, activation="relu", max_tm=512):
    """activation(x @ W.T + b) using pre-prepared (padded, transposed) params."""
    if activation not in _ACTIVATIONS:
        raise ValueError(f"Unsupported activation: {activation}")
    B, K = x.shape
    assert K == params["K"], "x last dim must equal input_dim"
    wt, b = params["wt"], params["b"]
    N, Np, Kp = params["N"], params["Np"], params["Kp"]
    tn, tk = params["tn"], params["tk"]

    # Batch tiling: pad B to a multiple of 8 (f32 sublane), pick tm dividing it.
    b8 = _round_up(B, 8)
    tm, bp = _pick_tile(b8, max_tm, 8)

    # Guarantee >= 2 "parallel" output blocks so both v7x TensorCores get work
    # (a 1x1 parallel grid leaves one TC idle; harmless extra step on v5e/v6e).
    if (bp // tm) * (Np // tn) < 2:
        if tn > 128:
            t = max(128, (tn // 2) // 128 * 128)
            while Np % t:
                t -= 128
            tn = t
        elif tm > 8:
            tm, bp = _pick_tile(b8, max(8, tm // 2), 8)

    xp = x if (bp == B and Kp == K) else jnp.pad(x, ((0, bp - B), (0, Kp - K)))

    grid_m, grid_n, grid_k = bp // tm, Np // tn, Kp // tk
    out_dtype = x.dtype
    out_is_f32 = out_dtype == jnp.float32

    if out_is_f32:
        kernel = functools.partial(_kernel_f32_out, activation=activation)
        scratch_shapes = []
    else:
        kernel = functools.partial(_kernel_narrow_out, activation=activation)
        scratch_shapes = [pltpu.VMEM((tm, tn), jnp.float32)]

    in_isz = x.dtype.itemsize
    w_isz = wt.dtype.itemsize
    out_isz = jnp.dtype(out_dtype).itemsize

    # Double-buffered VMEM footprint (+ f32 scratch if used); cap at 48 MiB so
    # the config stays safe inside v7x's 64 MiB per-TC VMEM.
    vmem_bytes = 2 * (tm * tk * in_isz + tk * tn * w_isz + tn * w_isz) + 2 * tm * tn * out_isz
    if not out_is_f32:
        vmem_bytes += tm * tn * 4
    vmem_limit = int(min(48 << 20, max(32 << 20, vmem_bytes * 5 // 4 + (4 << 20))))

    flops = 2 * bp * Np * Kp
    transcendentals = bp * Np if activation in ("selu", "tanh") else 0
    # Honest traffic: x is re-read grid_n times, W is re-read grid_m times.
    bytes_accessed = (
        grid_n * bp * Kp * in_isz
        + grid_m * Kp * Np * w_isz
        + Np * w_isz
        + bp * Np * out_isz
    )

    out = pl.pallas_call(
        kernel,
        out_shape=jax.ShapeDtypeStruct((bp, Np), out_dtype),
        grid_spec=pltpu.PrefetchScalarGridSpec(
            num_scalar_prefetch=0,
            grid=(grid_m, grid_n, grid_k),
            in_specs=[
                pl.BlockSpec((tm, tk), lambda i, j, k: (i, k)),  # x tile
                pl.BlockSpec((tk, tn), lambda i, j, k: (k, j)),  # W.T tile (K, N)
                pl.BlockSpec((1, tn), lambda i, j, k: (0, j)),   # bias tile
            ],
            out_specs=pl.BlockSpec((tm, tn), lambda i, j, k: (i, j)),
            scratch_shapes=scratch_shapes,
        ),
        compiler_params=pltpu.CompilerParams(
            dimension_semantics=("parallel", "parallel", "arbitrary"),
            vmem_limit_bytes=vmem_limit,
        ),
        cost_estimate=pl.CostEstimate(
            flops=flops,
            transcendentals=transcendentals,
            bytes_accessed=bytes_accessed,
        ),
    )(xp, wt, b)

    if bp != B or Np != N:
        out = out[:B, :N]
    return out


def linear_block(x, weight, bias, *, activation="relu",
                 max_tm=512, max_tn=512, max_tk=1024):
    """Convenience wrapper. For repeated inference, call prepare_params() once
    and reuse the result with linear_block_apply() to hoist the one-time weight
    transpose + padding out of the hot path."""
    params = prepare_params(weight, bias, max_tn=max_tn, max_tk=max_tk)
    return linear_block_apply(x, params, activation=activation, max_tm=max_tm)


def _reference(x, weight, bias, activation):
    out = x @ weight.T + bias
    return _apply_activation(out, activation)


if __name__ == "__main__":
    key = jax.random.PRNGKey(0)

    # ---- Test 1: small shapes matching LinearBlock(input_dim=32, output_dim=64,
    #             norm='none', activation='relu'), weights prepared once (hoisted).
    batch, input_dim, output_dim = 16, 32, 64
    kx, kw, kb = jax.random.split(key, 3)
    x = jax.random.normal(kx, (batch, input_dim), dtype=jnp.float32)
    bound = 1.0 / (input_dim ** 0.5)
    weight = jax.random.uniform(kw, (output_dim, input_dim),
                                minval=-bound, maxval=bound, dtype=jnp.float32)
    bias = jax.random.uniform(kb, (output_dim,),
                              minval=-bound, maxval=bound, dtype=jnp.float32)

    params = prepare_params(weight, bias)          # one-time pad + transpose
    out = jax.block_until_ready(linear_block_apply(x, params, activation="relu"))
    ref = _reference(x, weight, bias, "relu")
    assert out.shape == (batch, output_dim)
    assert jnp.allclose(out, ref, atol=1e-5, rtol=1e-5)

    # ---- Test 2: awkward sizes (B=200, K=384, N=320) exercising padding,
    #              tile divisor selection and the tanh epilogue (f32 path).
    k2 = jax.random.split(key, 4)
    B2, K2, N2 = 200, 384, 320
    x2 = jax.random.normal(k2[0], (B2, K2), dtype=jnp.float32)
    w2 = jax.random.normal(k2[1], (N2, K2), dtype=jnp.float32) * 0.05
    b2 = jax.random.normal(k2[2], (N2,), dtype=jnp.float32) * 0.05
    out2 = jax.block_until_ready(linear_block(x2, w2, b2, activation="tanh"))
    ref2 = _reference(x2, w2, b2, "tanh")
    assert out2.shape == (B2, N2)
    assert jnp.allclose(out2, ref2, atol=1e-4, rtol=1e-4)

    # ---- Test 3: bf16 end-to-end (MXU bf16 rate, f32 scratch accumulator) with
    #              a K reduction spanning multiple tiles (grid_k > 1).
    k3 = jax.random.split(key, 5)
    B3, K3, N3 = 64, 2048, 512
    x3 = jax.random.normal(k3[0], (B3, K3), dtype=jnp.bfloat16)
    w3 = (jax.random.normal(k3[1], (N3, K3), dtype=jnp.float32) * 0.02).astype(jnp.bfloat16)
    b3 = (jax.random.normal(k3[2], (N3,), dtype=jnp.float32) * 0.02).astype(jnp.bfloat16)
    out3 = jax.block_until_ready(linear_block(x3, w3, b3, activation="lrelu"))
    ref3 = _reference(x3.astype(jnp.float32), w3.astype(jnp.float32),
                      b3.astype(jnp.float32), "lrelu")
    assert out3.shape == (B3, N3)
    assert jnp.allclose(out3.astype(jnp.float32), ref3, atol=3e-2, rtol=3e-2)

    print("KERNEL_OK")
</pallas_src>

<mosaic_0001>
module attributes {stable_mosaic.version = 11 : i64} {
  func.func @_kernel_f32_out(%arg0: i32, %arg1: i32, %arg2: i32, %arg3: memref<8x128xf32, #tpu.memory_space<vmem>>, %arg4: memref<128x128xf32, #tpu.memory_space<vmem>>, %arg5: memref<1x128xf32, #tpu.memory_space<vmem>>, %arg6: memref<8x128xf32, #tpu.memory_space<vmem>>) attributes {dimension_semantics = [#tpu.dimension_semantics<parallel>, #tpu.dimension_semantics<parallel>, #tpu.dimension_semantics<arbitrary>], iteration_bounds = array<i64: 2, 1, 1>, scalar_prefetch = 0 : i64, scratch_operands = 0 : i64, tpu.core_type = #tpu.core_type<tc>, window_params = [{transform_indices = @transform_0, window_bounds = array<i64: 8, 128>}, {transform_indices = @transform_1, window_bounds = array<i64: 128, 128>}, {transform_indices = @transform_2, window_bounds = array<i64: 1, 128>}, {transform_indices = @transform_3, window_bounds = array<i64: 8, 128>}]} {
    %c0_i32 = arith.constant 0 : i32
    %0 = arith.cmpi eq, %arg2, %c0_i32 : i32
    %1 = arith.extui %0 : i1 to i32
    %c0_i32_0 = arith.constant 0 : i32
    %2 = arith.cmpi ne, %1, %c0_i32_0 : i32
    scf.if %2 {
      %cst_10 = arith.constant 0.000000e+00 : f32
      %12 = vector.broadcast %cst_10 : f32 to vector<8x128xf32>
      %c0_11 = arith.constant 0 : index
      %c0_12 = arith.constant 0 : index
      %13 = vector.load %arg6[%c0_11, %c0_12] : memref<8x128xf32, #tpu.memory_space<vmem>>, vector<8x128xf32>
      tpu.vector_store %arg6[%c0_11, %c0_12], %12 {strides = array<i32>} : memref<8x128xf32, #tpu.memory_space<vmem>>, vector<8x128xf32>,
    } else {
    }
    %c0 = arith.constant 0 : index
    %c0_1 = arith.constant 0 : index
    %3 = vector.load %arg6[%c0, %c0_1] : memref<8x128xf32, #tpu.memory_space<vmem>>, vector<8x128xf32>
    %c0_2 = arith.constant 0 : index
    %c0_3 = arith.constant 0 : index
    %4 = vector.load %arg3[%c0_2, %c0_3] : memref<8x128xf32, #tpu.memory_space<vmem>>, vector<8x128xf32>
    %c0_4 = arith.constant 0 : index
    %c0_5 = arith.constant 0 : index
    %5 = vector.load %arg4[%c0_4, %c0_5] : memref<128x128xf32, #tpu.memory_space<vmem>>, vector<128x128xf32>
    %cst = arith.constant dense<0.000000e+00> : vector<8x128xf32>
    %6 = tpu.matmul %4, %5, %cst {dimension_numbers = #tpu.dot_dimension_numbers<[1], [0], [0], [1], [0, 0, 1, 1], [], []>} : vector<8x128xf32>, vector<128x128xf32>, vector<8x128xf32> -> vector<8x128xf32>
    %7 = arith.addf %3, %6 : vector<8x128xf32>
    %c0_6 = arith.constant 0 : index
    %c0_7 = arith.constant 0 : index
    %8 = vector.load %arg6[%c0_6, %c0_7] : memref<8x128xf32, #tpu.memory_space<vmem>>, vector<8x128xf32>
    tpu.vector_store %arg6[%c0_6, %c0_7], %7 {strides = array<i32>} : memref<8x128xf32, #tpu.memory_space<vmem>>, vector<8x128xf32>,
    %c0_i32_8 = arith.constant 0 : i32
    %9 = arith.cmpi eq, %arg2, %c0_i32_8 : i32
    %10 = arith.extui %9 : i1 to i32
    %c0_i32_9 = arith.constant 0 : i32
    %11 = arith.cmpi ne, %10, %c0_i32_9 : i32
    scf.if %11 {
      %c0_10 = arith.constant 0 : index
      %c0_11 = arith.constant 0 : index
      %12 = vector.load %arg6[%c0_10, %c0_11] : memref<8x128xf32, #tpu.memory_space<vmem>>, vector<8x128xf32>
      %c0_12 = arith.constant 0 : index
      %c0_13 = arith.constant 0 : index
      %13 = vector.load %arg5[%c0_12, %c0_13] : memref<1x128xf32, #tpu.memory_space<vmem>>, vector<1x128xf32>
      %14 = vector.broadcast %13 : vector<1x128xf32> to vector<8x128xf32>
      %15 = arith.addf %12, %14 : vector<8x128xf32>
      %cst_14 = arith.constant 0.000000e+00 : f32
      %16 = vector.broadcast %cst_14 : f32 to vector<8x128xf32>
      %17 = arith.maximumf %15, %16 : vector<8x128xf32>
      %c0_15 = arith.constant 0 : index
      %c0_16 = arith.constant 0 : index
      %18 = vector.load %arg6[%c0_15, %c0_16] : memref<8x128xf32, #tpu.memory_space<vmem>>, vector<8x128xf32>
      tpu.vector_store %arg6[%c0_15, %c0_16], %17 {strides = array<i32>} : memref<8x128xf32, #tpu.memory_space<vmem>>, vector<8x128xf32>,
    } else {
    }
    return
  }
  func.func @transform_0(%arg0: i32, %arg1: i32, %arg2: i32) -> (i32, i32) {
    %c0_i32 = arith.constant 0 : i32
    return %arg0, %arg2 : i32, i32
  }
  func.func @transform_1(%arg0: i32, %arg1: i32, %arg2: i32) -> (i32, i32) {
    %c0_i32 = arith.constant 0 : i32
    return %arg2, %arg1 : i32, i32
  }
  func.func @transform_2(%arg0: i32, %arg1: i32, %arg2: i32) -> (i32, i32) {
    %c0_i32 = arith.constant 0 : i32
    %c0_i32_0 = arith.constant 0 : i32
    return %c0_i32, %arg1 : i32, i32
  }
  func.func @transform_3(%arg0: i32, %arg1: i32, %arg2: i32) -> (i32, i32) {
    %c0_i32 = arith.constant 0 : i32
    return %arg0, %arg1 : i32, i32
  }
}

</mosaic_0001>

<llo_original>
// kernel: tpu_custom_call.1
$region0: #{tpu_custom_call.1}
  #allocation0 [shape = 'u32[]', space=smem, size = 0x4, offset = 0x4, fixed_abs, tag = 'smem constant byte address 0x4 - core index']
  #allocation1 [shape = 'u32[72,128]{1,0:T(1,128)}', space=vmem, size = 0x9000, scoped, tag = 'internal scratch']
  %s0 = inlined_call_operand.hbm [shape: f32[16,128], index: 0, kind: input, shape index: {}]
  %s1 = inlined_call_operand.hbm [shape: f32[128,128], index: 1, kind: input, shape index: {}]
  %s2 = inlined_call_operand.vmem [shape: f32[1,128], index: 2, kind: input, shape index: {}]
  %s3 = inlined_call_operand.hbm [shape: f32[16,128], index: 3, kind: output, shape index: {}]
  %s4 = sld [smem:[#allocation0]]
  $region61: #{tpu_custom_call.1} parent=0
    _
  %s6 = ssub.s32 1, %s4
  %s7 = scalar_select 0, %s6, %s4
  $region1: #{tpu_custom_call.1} parent=0
    #allocation2 [shape = 'u8[8192]{0}', space=vmem, size = 0x2000, scoped, tag = 'input window, operand 0']
    #allocation3 [shape = 's32[2]{0}', space=sflag, size = 0x8, scoped, tag = 'scoped memory for tpu_custom_call.1']
    #allocation4 [shape = 's32[2]{0}', space=sflag, size = 0x8, scoped, tag = 'scoped memory for tpu_custom_call.1']
    #allocation5 [shape = 'u8[65536]{0}', space=vmem, size = 0x10000, scoped, tag = 'input window, operand 1, single buffered']
    #allocation6 [shape = 's32[1]{0}', space=sflag, size = 0x4, scoped, tag = 'scoped memory for tpu_custom_call.1']
    #allocation7 [shape = 'u8[8192]{0}', space=vmem, size = 0x2000, scoped, tag = 'output window, operand 0']
    %8 = vsyncpa [#allocation3], 0
    %s9 = scalar_lea.sflag [#allocation3], 1
    %10 = vsyncpa %s9, 0
    %11 = vsyncpa [#allocation6], 0
    %12 = vsyncpa [#allocation4], 0
    %s13 = scalar_lea.sflag [#allocation4], 1
    %14 = vsyncpa %s13, 0
    loop: start=0, step=1, limit=4
    $region2: #{tpu_custom_call.1} parent=1 // loop_pre_header
      _
    $region3: #{tpu_custom_call.1} parent=1 // loop_header
      %s16 = sphi 0, %s20
      %p17 = scmp.ge.s32.totalorder %s16, 4
      %s23 = sphi 0, %s42
      %s24 = sphi 0, %s38
      %s25 = sphi 0, %s34
      %s26 = sphi 0, %s23
      %s27 = sphi 0, %s24
      %s28 = sphi 0, %s25
      %s29 = sphi 0, %s26
      %s30 = sphi 0, %s27
      %s31 = sphi 0, %s28
      %s47 = sphi 0, %s49
      %s50 = sphi 0, %s47
      %s51 = sphi 0, %s50
      %s67 = sphi 0, %s51
      %s75 = sphi 0, %s77
      %s78 = sphi 0, %s75
      %s79 = sphi 0, %s78
      %s95 = sphi 0, %s79
      %s101 = sphi 0, %s103
      %s104 = sphi 0, %s101
      %s105 = sphi 0, %s104
      %s121 = sphi 0, %s105
      %s129 = sphi 0, %s131
      %s132 = sphi 0, %s129
      %s133 = sphi 0, %s132
      %s149 = sphi 0, %s133
    $region4: #{tpu_custom_call.1} parent=1 // loop_header_branch
      %19 = sbr.rel (%p17) target = $region8
    $region5: #{tpu_custom_call.1} parent=1 // loop_body
      %s21 = ssub.s32 %s16, 1
      %s22 = ssub.s32 %s16, 2
      %s32 = sadd.s32 1, %s25
      %p33 = scmp.ge.s32.totalorder %s32, 1
      %s34 = scalar_select %p33, 0, %s32
      %s35 = sadd.s32 1, %s24
      %s36 = scalar_select %p33, %s35, %s24
      %p37 = scmp.ge.s32.totalorder %s36, 1
      %s38 = scalar_select %p37, 0, %s36
      %s39 = sadd.s32 1, %s23
      %s40 = scalar_select %p37, %s39, %s23
      %p41 = scmp.ge.s32.totalorder %s40, 2
      %s42 = scalar_select %p41, 0, %s40
      %s43 = ssub.s32 %s23, %s42
      %s44 = ssub.s32 %s25, %s34
      %s45 = sor.u32 %s43, %s44
      %p46 = scmp.eq.s32.totalorder %s45, 0
      %s48 = sadd.s32 %s47, 1
      %s49 = scalar_select %p46, %s47, %s48
      %p52 = pneg %p46
      %p53 = scmp.eq.s32.totalorder %s16, 1
      %p54 = por %p52, %p53
      %p55 = scmp.ne.s32.totalorder %s47, %s50
      %p56 = scmp.eq.s32.totalorder %s16, 0
      %p57 = por %p55, %p56
      %p58 = scmp.ne.s32.totalorder %s47, %s50
      %p59 = scmp.eq.s32.totalorder %s21, 1
      %p60 = por %p58, %p59
      %p61 = scmp.ne.s32.totalorder %s50, %s51
      %p62 = scmp.eq.s32.totalorder %s21, 0
      %p63 = por %p61, %p62
      %p64 = scmp.ne.s32.totalorder %s50, %s51
      %p65 = scmp.eq.s32.totalorder %s22, 1
      %p66 = por %p64, %p65
      %p68 = scmp.ne.s32.totalorder %s51, %s67
      %p69 = scmp.eq.s32.totalorder %s22, 0
      %p70 = por %p68, %p69
      %s71 = ssub.s32 %s25, %s34
      %s72 = ssub.s32 %s24, %s38
      %s73 = sor.u32 %s71, %s72
      %p74 = scmp.eq.s32.totalorder %s73, 0
      %s76 = sadd.s32 %s75, 1
      %s77 = scalar_select %p74, %s75, %s76
      %p80 = pneg %p74
      %p81 = scmp.eq.s32.totalorder %s16, 1
      %p82 = por %p80, %p81
      %p83 = scmp.ne.s32.totalorder %s75, %s78
      %p84 = scmp.eq.s32.totalorder %s16, 0
      %p85 = por %p83, %p84
      %p86 = scmp.ne.s32.totalorder %s75, %s78
      %p87 = scmp.eq.s32.totalorder %s21, 1
      %p88 = por %p86, %p87
      %p89 = scmp.ne.s32.totalorder %s78, %s79
      %p90 = scmp.eq.s32.totalorder %s21, 0
      %p91 = por %p89, %p90
      %p92 = scmp.ne.s32.totalorder %s78, %s79
      %p93 = scmp.eq.s32.totalorder %s22, 1
      %p94 = por %p92, %p93
      %p96 = scmp.ne.s32.totalorder %s79, %s95
      %p97 = scmp.eq.s32.totalorder %s22, 0
      %p98 = por %p96, %p97
      %s99 = ssub.s32 %s24, %s38
      %p100 = scmp.eq.s32.totalorder %s99, 0
      %s102 = sadd.s32 %s101, 1
      %s103 = scalar_select %p100, %s101, %s102
      %p106 = pneg %p100
      %p107 = scmp.eq.s32.totalorder %s16, 1
      %p108 = por %p106, %p107
      %p109 = scmp.ne.s32.totalorder %s101, %s104
      %p110 = scmp.eq.s32.totalorder %s16, 0
      %p111 = por %p109, %p110
      %p112 = scmp.ne.s32.totalorder %s101, %s104
      %p113 = scmp.eq.s32.totalorder %s21, 1
      %p114 = por %p112, %p113
      %p115 = scmp.ne.s32.totalorder %s104, %s105
      %p116 = scmp.eq.s32.totalorder %s21, 0
      %p117 = por %p115, %p116
      %p118 = scmp.ne.s32.totalorder %s104, %s105
      %p119 = scmp.eq.s32.totalorder %s22, 1
      %p120 = por %p118, %p119
      %p122 = scmp.ne.s32.totalorder %s105, %s121
      %p123 = scmp.eq.s32.totalorder %s22, 0
      %p124 = por %p122, %p123
      %s125 = ssub.s32 %s23, %s42
      %s126 = ssub.s32 %s24, %s38
      %s127 = sor.u32 %s125, %s126
      %p128 = scmp.eq.s32.totalorder %s127, 0
      %s130 = sadd.s32 %s129, 1
      %s131 = scalar_select %p128, %s129, %s130
      %p134 = pneg %p128
      %p135 = scmp.eq.s32.totalorder %s16, 1
      %p136 = por %p134, %p135
      %p137 = scmp.ne.s32.totalorder %s129, %s132
      %p138 = scmp.eq.s32.totalorder %s16, 0
      %p139 = por %p137, %p138
      %p140 = scmp.ne.s32.totalorder %s129, %s132
      %p141 = scmp.eq.s32.totalorder %s21, 1
      %p142 = por %p140, %p141
      %p143 = scmp.ne.s32.totalorder %s132, %s133
      %p144 = scmp.eq.s32.totalorder %s21, 0
      %p145 = por %p143, %p144
      %p146 = scmp.ne.s32.totalorder %s132, %s133
      %p147 = scmp.eq.s32.totalorder %s22, 1
      %p148 = por %p146, %p147
      %p150 = scmp.ne.s32.totalorder %s133, %s149
      %p151 = scmp.eq.s32.totalorder %s22, 0
      %p152 = por %p150, %p151
      %p153 = scmp.le.s32.totalorder 1, %s16
      %p154 = scmp.lt.s32.totalorder %s16, 3
      %p155 = pnand %p153, %p154
      %p156 = pneg %p155
      // Predicated region
      $region9: #{tpu_custom_call.1} parent=5 // pred_check
        _
      $region10: #{tpu_custom_call.1} parent=5 // pred_check_branch
        %158 = sbr.rel (%p155) target = $region12
      $region11: #{tpu_custom_call.1} parent=5 // pred_region
        %s159 = ssub.s32 %s16, 1
        // Predicated region
        $region13: #{tpu_custom_call.1} parent=11 // pred_check
          %p160 = pneg %p91
        $region14: #{tpu_custom_call.1} parent=11 // pred_check_branch
          %162 = sbr.rel (%p160) target = $region16
        $region15: #{tpu_custom_call.1} parent=11 // pred_region
          %s163 = smul.u32 16, %s28
          %165 = vsyncadd [#allocation6], 0
          %s166 = sadd.s32 %s27, %s163
          %s167 = smul.addr %s166, 8
          %s168 = scalar_lea.hbm %s1, %s167
          %s169 = sshll.u32 %s168, 4
          %s170 = int_to_ptr.hbm [resolvable:$true] %s169
          %s171 = sshll.u32 [#allocation5], 4
          %s172 = int_to_ptr.vmem [resolvable:$true] %s171
          %177 = dma.hbm_to_vmem [thread:$0]  %s170, 2048, %s172, [#allocation6], 128, 128, 8
        $region16: #{tpu_custom_call.1} parent=11 // pred_fallthru
          _
        // Predicated region
        $region17: #{tpu_custom_call.1} parent=11 // pred_check
          %p178 = pneg %p117
        $region18: #{tpu_custom_call.1} parent=11 // pred_check_branch
          %180 = sbr.rel (%p178) target = $region20
        $region19: #{tpu_custom_call.1} parent=11 // pred_region
          %p181 = scmp.lt.s32.totalorder %s27, 0
          %s182 = scalar_select %p181, %s27, 0
          %s183 = scalar_lea.vmem %s2, %s182
        $region20: #{tpu_custom_call.1} parent=11 // pred_fallthru
          _
      $region12: #{tpu_custom_call.1} parent=5 // pred_fallthru
        _
      %p184 = scmp.lt.s32.totalorder %s16, 2
      // Predicated region
      $region21: #{tpu_custom_call.1} parent=5 // pred_check
        %p185 = pneg %p184
      $region22: #{tpu_custom_call.1} parent=5 // pred_check_branch
        %187 = sbr.rel (%p185) target = $region24
      $region23: #{tpu_custom_call.1} parent=5 // pred_region
        // Predicated region
        $region25: #{tpu_custom_call.1} parent=23 // pred_check
          %p188 = pneg %p57
        $region26: #{tpu_custom_call.1} parent=23 // pred_check_branch
          %190 = sbr.rel (%p188) target = $region28
        $region27: #{tpu_custom_call.1} parent=23 // pred_region
          %s191 = sand.u32 %s47, 1
          %s192 = scalar_lea.sflag [#allocation3], %s191
          %s193 = sand.u32 %s47, 1
          %s194 = smul.addr %s193, 8
          %s195 = scalar_lea.vmem [#allocation2], %s194
          %197 = vsyncadd %s192, 0
          %s198 = sadd.s32 %s25, %s23
          %s199 = smul.addr %s198, 8
          %s200 = scalar_lea.hbm %s0, %s199
          %s202 = sshll.u32 %s200, 4
          %s203 = int_to_ptr.hbm [resolvable:$true] %s202
          %s204 = sshll.u32 %s195, 4
          %s205 = int_to_ptr.vmem [resolvable:$true] %s204
          %207 = dma.hbm_to_vmem [thread:$0]  %s203, 128, %s205, %s192
        $region28: #{tpu_custom_call.1} parent=23 // pred_fallthru
          _
      $region24: #{tpu_custom_call.1} parent=5 // pred_fallthru
        _
      %p208 = scmp.le.s32.totalorder 1, %s16
      %p209 = scmp.lt.s32.totalorder %s16, 3
      %p210 = pnand %p208, %p209
      %p211 = pneg %p210
      // Predicated region
      $region29: #{tpu_custom_call.1} parent=5 // pred_check
        _
      $region30: #{tpu_custom_call.1} parent=5 // pred_check_branch
        %213 = sbr.rel (%p210) target = $region32
      $region31: #{tpu_custom_call.1} parent=5 // pred_region
        %s214 = ssub.s32 %s16, 1
        %s215 = sand.u32 %s50, 1
        %s216 = scalar_lea.sflag [#allocation3], %s215
        %s217 = sand.u32 %s50, 1
        %s218 = smul.addr %s217, 8
        %s219 = scalar_lea.vmem [#allocation2], %s218
        // Predicated region
        $region33: #{tpu_custom_call.1} parent=31 // pred_check
          %p220 = pneg %p63
        $region34: #{tpu_custom_call.1} parent=31 // pred_check_branch
          %222 = sbr.rel (%p220) target = $region36
        $region35: #{tpu_custom_call.1} parent=31 // pred_region
          %224 = dma.done %s216, 128
        $region36: #{tpu_custom_call.1} parent=31 // pred_fallthru
          _
        // Predicated region
        $region37: #{tpu_custom_call.1} parent=31 // pred_check
          %p225 = pneg %p91
        $region38: #{tpu_custom_call.1} parent=31 // pred_check_branch
          %227 = sbr.rel (%p225) target = $region40
        $region39: #{tpu_custom_call.1} parent=31 // pred_region
          %229 = dma.done [#allocation6], 2048
        $region40: #{tpu_custom_call.1} parent=31 // pred_fallthru
          _
        %s230 = sand.u32 %s50, 1
        %s231 = scalar_lea.sflag [#allocation3], %s230
        %s232 = sand.u32 %s50, 1
        %s233 = smul.addr %s232, 8
        %s234 = scalar_lea.vmem [#allocation2], %s233
        %p235 = pneg %p63
        %p236 = pneg %p60
        %p237 = pneg %p91
        %p238 = pneg %p88
        %p239 = scmp.lt.s32.totalorder %s27, 0
        %s240 = scalar_select %p239, %s27, 0
        %s241 = scalar_lea.vmem %s2, %s240
        %p242 = pneg %p117
        %p243 = pneg %p114
        %p244 = pneg %p145
        %p245 = pneg %p142
        %s246 = sand.u32 %s132, 1
        %s247 = scalar_lea.sflag [#allocation4], %s246
        %s248 = sand.u32 %s132, 1
        %s249 = smul.addr %s248, 8
        %s250 = scalar_lea.vmem [#allocation7], %s249
        %s251 = smul.u32 16, %s28
        %p252 = scmp.lt.s32.totalorder %s27, 0
        %s253 = scalar_select %p252, %s27, 0
        %s254 = scalar_lea.vmem %s2, %s253
        %p255 = scmp.eq.s32.totalorder %s28, 0
        // Predicated region
        $region41: #{tpu_custom_call.1} parent=31 // pred_check
          %p256 = pneg %p255
        $region42: #{tpu_custom_call.1} parent=31 // pred_check_branch
          %258 = sbr.rel (%p256) target = $region44
        $region43: #{tpu_custom_call.1} parent=31 // pred_region
          %259 = vst [vmem:[%s250] sm:$0xff] 0.0
        $region44: #{tpu_custom_call.1} parent=31 // pred_fallthru
          _
        %v260 = vld [vmem:[%s250] sm:$0xff]
        %v261 = vld [vmem:[%s219] sm:$0xff]
        %v262 = vld [vmem:[#allocation5] sm:$0xff]
        %v263 = vld [vmem:[#allocation5 + $0x8] sm:$0xff]
        %v264 = vld [vmem:[#allocation5 + $0x10] sm:$0xff]
        %v265 = vld [vmem:[#allocation5 + $0x18] sm:$0xff]
        %v266 = vld [vmem:[#allocation5 + $0x20] sm:$0xff]
        %v267 = vld [vmem:[#allocation5 + $0x28] sm:$0xff]
        %v268 = vld [vmem:[#allocation5 + $0x30] sm:$0xff]
        %v269 = vld [vmem:[#allocation5 + $0x38] sm:$0xff]
        %v270 = vld [vmem:[#allocation5 + $0x40] sm:$0xff]
        %v271 = vld [vmem:[#allocation5 + $0x48] sm:$0xff]
        %v272 = vld [vmem:[#allocation5 + $0x50] sm:$0xff]
        %v273 = vld [vmem:[#allocation5 + $0x58] sm:$0xff]
        %v274 = vld [vmem:[#allocation5 + $0x60] sm:$0xff]
        %v275 = vld [vmem:[#allocation5 + $0x68] sm:$0xff]
        %v276 = vld [vmem:[#allocation5 + $0x70] sm:$0xff]
        %v277 = vld [vmem:[#allocation5 + $0x78] sm:$0xff]
        %278 = vmatpush.msra.mxu0 %v277
        %279 = vmatpush.msra.mxu0 %v276
        %280 = vmatpush.msra.mxu0 %v275
        %281 = vmatpush.msra.mxu0 %v274
        %282 = vmatpush.msra.mxu0 %v273
        %283 = vmatpush.msra.mxu0 %v272
        %284 = vmatpush.msra.mxu0 %v271
        %285 = vmatpush.msra.mxu0 %v270
        %286 = vmatpush.msra.mxu0 %v269
        %287 = vmatpush.msra.mxu0 %v268
        %288 = vmatpush.msra.mxu0 %v267
        %289 = vmatpush.msra.mxu0 %v266
        %290 = vmatpush.msra.mxu0 %v265
        %291 = vmatpush.msra.mxu0 %v264
        %292 = vmatpush.msra.mxu0 %v263
        %293 = vmatpush.msra.mxu0 %v262
        %294 = vmatmul.f32.gmra.mxu0 %v261
        %v295 = vpop.f32.mrf.mxu0
        %v296 = vadd.f32 0.0, %v295
        %297 = vdwg.mxu0
        %v298 = vadd.f32 %v260, %v296
        %299 = vst [vmem:[%s250] sm:$0xff] %v298
        // Predicated region
        $region45: #{tpu_custom_call.1} parent=31 // pred_check
          %p300 = pneg %p255
        $region46: #{tpu_custom_call.1} parent=31 // pred_check_branch
          %302 = sbr.rel (%p300) target = $region48
        $region47: #{tpu_custom_call.1} parent=31 // pred_region
          %v303 = vld [vmem:[%s250] sm:$0xff]
          %v304 = vld [vmem:[%s254] sm:$0x1]
          %v306 = vperm.slane %v304, 0
          %v308 = vadd.f32 %v303, %v306
          %v309 = vmax.f32 %v308, 0.0
          %310 = vst [vmem:[%s250] sm:$0xff] %v309
        $region48: #{tpu_custom_call.1} parent=31 // pred_fallthru
          _
        %s311 = sand.u32 %s132, 1
        %s312 = scalar_lea.sflag [#allocation4], %s311
        %s313 = sand.u32 %s132, 1
        %s314 = smul.addr %s313, 8
        %s315 = scalar_lea.vmem [#allocation7], %s314
        // Predicated region
        $region49: #{tpu_custom_call.1} parent=31 // pred_check
          %p316 = pneg %p142
        $region50: #{tpu_custom_call.1} parent=31 // pred_check_branch
          %318 = sbr.rel (%p316) target = $region52
        $region51: #{tpu_custom_call.1} parent=31 // pred_region
          %320 = vsyncadd %s312, 0
          %s321 = sadd.s32 %s27, %s26
          %s322 = smul.addr %s321, 8
          %s323 = scalar_lea.hbm %s3, %s322
          %s325 = sshll.u32 %s315, 4
          %s326 = int_to_ptr.vmem [resolvable:$true] %s325
          %s327 = sshll.u32 %s323, 4
          %s328 = int_to_ptr.hbm [resolvable:$true] %s327
          %330 = dma.vmem_to_hbm [thread:$0]  %s326, 128, %s328, %s312
        $region52: #{tpu_custom_call.1} parent=31 // pred_fallthru
          _
      $region32: #{tpu_custom_call.1} parent=5 // pred_fallthru
        _
      %p331 = scmp.le.s32.totalorder 2, %s16
      // Predicated region
      $region53: #{tpu_custom_call.1} parent=5 // pred_check
        %p332 = pneg %p331
      $region54: #{tpu_custom_call.1} parent=5 // pred_check_branch
        %334 = sbr.rel (%p332) target = $region56
      $region55: #{tpu_custom_call.1} parent=5 // pred_region
        %s335 = ssub.s32 %s16, 2
        // Predicated region
        $region57: #{tpu_custom_call.1} parent=55 // pred_check
          %p336 = pneg %p148
        $region58: #{tpu_custom_call.1} parent=55 // pred_check_branch
          %338 = sbr.rel (%p336) target = $region60
        $region59: #{tpu_custom_call.1} parent=55 // pred_region
          %s339 = sand.u32 %s133, 1
          %s340 = scalar_lea.sflag [#allocation4], %s339
          %s341 = sand.u32 %s133, 1
          %s342 = smul.addr %s341, 8
          %s343 = scalar_lea.vmem [#allocation7], %s342
          %345 = dma.done %s340, 128
        $region60: #{tpu_custom_call.1} parent=55 // pred_fallthru
          _
      $region56: #{tpu_custom_call.1} parent=5 // pred_fallthru
        _
    $region6: #{tpu_custom_call.1} parent=1 // loop_footer
      %s20 = sadd.s32 1, %s16
    $region7: #{tpu_custom_call.1} parent=1 // loop_footer_branch
      %15 = sbr.rel target = $region3
    $region8: #{tpu_custom_call.1} parent=1 // loop_exit
      _
    %346 = vsyncpa [#allocation3], 1
    %s347 = scalar_lea.sflag [#allocation3], 1
    %348 = vsyncpa %s347, 1
    %349 = vsyncpa [#allocation6], 1
    %350 = vsyncpa [#allocation4], 1
    %s351 = scalar_lea.sflag [#allocation4], 1
    %352 = vsyncpa %s351, 1

</llo_original>
